<compile_context>
chip_gen: v5e
topology: v5e:2x2
jax: 0.10.0
libtpu: 0.0.40
codegen_flags: <defaults>
</compile_context>

<pallas_src>
import functools
import math

import jax
import jax.numpy as jnp
from jax import lax
from jax.experimental import pallas as pl
from jax.experimental.pallas import tpu as pltpu


LN_EPS = 1e-12
ROW_TILE_TARGET = 256                 # 256-aligned for v6e/v7x MXU, 128-multiple for v5e
VMEM_LIMIT_BYTES = 64 * 1024 * 1024


# ----------------------------- small helpers -------------------------------

def _round_up(x, m):
    return ((x + m - 1) // m) * m


def _row_tile(M, target=ROW_TILE_TARGET):
    tm = target if M >= target else _round_up(M, 8)
    return tm, _round_up(M, tm)


def _pad_rows(x, Mp):
    M = x.shape[0]
    return x if Mp == M else jnp.pad(x, ((0, Mp - M), (0, 0)))


def _mosaic_params(n_parallel=1):
    return pltpu.CompilerParams(
        dimension_semantics=("parallel",) * n_parallel,
        vmem_limit_bytes=VMEM_LIMIT_BYTES)


def _gelu(y):
    # TODO(synk): HF BERT uses erf-GELU; tanh approximation keeps it on the EUP.
    return 0.5 * y * (1.0 + jnp.tanh(0.7978845608028654 * (y + 0.044715 * y * y * y)))


def _layer_norm(h, g, b, eps):
    mean = jnp.mean(h, axis=-1, keepdims=True)
    var = jnp.mean(jnp.square(h - mean), axis=-1, keepdims=True)
    return (h - mean) * lax.rsqrt(var + eps) * g + b


# ----------------------------- Pallas kernels ------------------------------

def _ln_kernel(x_ref, g_ref, b_ref, o_ref, *, eps):
    h = x_ref[...].astype(jnp.float32)
    o_ref[...] = _layer_norm(h, g_ref[...], b_ref[...], eps).astype(o_ref.dtype)


def layernorm(x, gamma, beta, *, eps=LN_EPS, out_dtype=jnp.bfloat16):
    M, H = x.shape
    tm, Mp = _row_tile(M)
    xp = _pad_rows(x, Mp)
    kern = functools.partial(_ln_kernel, eps=eps)
    out = pl.pallas_call(
        kern,
        out_shape=jax.ShapeDtypeStruct((Mp, H), out_dtype),
        grid=(Mp // tm,),
        in_specs=[pl.BlockSpec((tm, H), lambda i: (i, 0)),
                  pl.BlockSpec((1, H), lambda i: (0, 0)),
                  pl.BlockSpec((1, H), lambda i: (0, 0))],
        out_specs=pl.BlockSpec((tm, H), lambda i: (i, 0)),
        compiler_params=_mosaic_params(),
    )(xp, gamma.reshape(1, H), beta.reshape(1, H))
    return out[:M]


def _attn_block_kernel(h_ref, qkvw_ref, qkvb_ref, mb_ref, aow_ref, aob_ref,
                       g_ref, be_ref, o_ref, *, n_heads, scale, eps):
    # One batch element per grid step.  Fuses:
    #   QKV proj -> per-head attention -> output proj -> residual -> LayerNorm.
    x = h_ref[0]                                            # (S, H) bf16
    H = x.shape[-1]
    Dh = H // n_heads

    qkv = jnp.dot(x, qkvw_ref[...], preferred_element_type=jnp.float32)
    qkv = (qkv + qkvb_ref[...]).astype(jnp.bfloat16)        # (S, 3H)
    mb = mb_ref[0]                                          # (1, S) additive mask bias

    heads = []
    for hh in range(n_heads):                               # static unroll over heads
        qh = qkv[:, hh * Dh:(hh + 1) * Dh]                  # (S, Dh)
        kh = qkv[:, H + hh * Dh:H + (hh + 1) * Dh]
        vh = qkv[:, 2 * H + hh * Dh:2 * H + (hh + 1) * Dh]
        s = jnp.einsum('qd,kd->qk', qh, kh,
                       preferred_element_type=jnp.float32) * scale + mb
        s = s - jnp.max(s, axis=-1, keepdims=True)          # f32 softmax math
        p = jnp.exp(s)
        p = p * pl.reciprocal(jnp.sum(p, axis=-1, keepdims=True), approx=True)
        heads.append(jnp.dot(p.astype(jnp.bfloat16), vh,
                             preferred_element_type=jnp.float32))
    ctx = jnp.concatenate(heads, axis=-1).astype(jnp.bfloat16)   # (S, H)

    y = jnp.dot(ctx, aow_ref[...], preferred_element_type=jnp.float32) + aob_ref[...]
    hres = y + x.astype(jnp.float32)                        # residual = block input
    o_ref[0] = _layer_norm(hres, g_ref[...], be_ref[...], eps).astype(o_ref.dtype)


def attention_block(h, qkv_w, qkv_b, mask_bias, ao_w, ao_b, gamma, beta,
                    *, n_heads, scale, eps=LN_EPS, out_dtype=jnp.bfloat16):
    B, S, H = h.shape
    kern = functools.partial(_attn_block_kernel, n_heads=n_heads, scale=scale, eps=eps)
    return pl.pallas_call(
        kern,
        out_shape=jax.ShapeDtypeStruct((B, S, H), out_dtype),
        grid=(B,),
        in_specs=[pl.BlockSpec((1, S, H), lambda b: (b, 0, 0)),
                  pl.BlockSpec((H, 3 * H), lambda b: (0, 0)),
                  pl.BlockSpec((1, 3 * H), lambda b: (0, 0)),
                  pl.BlockSpec((1, 1, S), lambda b: (b, 0, 0)),
                  pl.BlockSpec((H, H), lambda b: (0, 0)),
                  pl.BlockSpec((1, H), lambda b: (0, 0)),
                  pl.BlockSpec((1, H), lambda b: (0, 0)),
                  pl.BlockSpec((1, H), lambda b: (0, 0))],
        out_specs=pl.BlockSpec((1, S, H), lambda b: (b, 0, 0)),
        compiler_params=_mosaic_params(),
    )(h, qkv_w, qkv_b.reshape(1, 3 * H), mask_bias, ao_w, ao_b.reshape(1, H),
      gamma.reshape(1, H), beta.reshape(1, H))


def _ffn_add_ln_kernel(x_ref, iw_ref, ib_ref, ow_ref, ob_ref, g_ref, be_ref, o_ref, *, eps):
    x = x_ref[...]
    t = jnp.dot(x, iw_ref[...], preferred_element_type=jnp.float32) + ib_ref[...]
    t = _gelu(t)                                                   # f32 math (v5e safe)
    y = jnp.dot(t.astype(ow_ref.dtype), ow_ref[...],
                preferred_element_type=jnp.float32) + ob_ref[...]
    h = y + x.astype(jnp.float32)                                  # residual = FFN input
    o_ref[...] = _layer_norm(h, g_ref[...], be_ref[...], eps).astype(o_ref.dtype)


def ffn_add_ln(x, i_w, i_b, o_w, o_b, gamma, beta, *, eps=LN_EPS, out_dtype=jnp.bfloat16):
    """Fused FFN: gelu(x@i_w+i_b)@o_w+o_b + x -> LayerNorm (intermediate stays in VMEM)."""
    M, H = x.shape
    I = i_w.shape[1]
    tm, Mp = _row_tile(M)
    xp = _pad_rows(x, Mp)
    kern = functools.partial(_ffn_add_ln_kernel, eps=eps)
    out = pl.pallas_call(
        kern,
        out_shape=jax.ShapeDtypeStruct((Mp, H), out_dtype),
        grid=(Mp // tm,),
        in_specs=[pl.BlockSpec((tm, H), lambda i: (i, 0)),
                  pl.BlockSpec((H, I), lambda i: (0, 0)),
                  pl.BlockSpec((1, I), lambda i: (0, 0)),
                  pl.BlockSpec((I, H), lambda i: (0, 0)),
                  pl.BlockSpec((1, H), lambda i: (0, 0)),
                  pl.BlockSpec((1, H), lambda i: (0, 0)),
                  pl.BlockSpec((1, H), lambda i: (0, 0))],
        out_specs=pl.BlockSpec((tm, H), lambda i: (i, 0)),
        compiler_params=_mosaic_params(),
    )(xp, i_w, i_b.reshape(1, I), o_w, o_b.reshape(1, H),
      gamma.reshape(1, H), beta.reshape(1, H))
    return out[:M]


def _crf_kernel(seqlen_ref, h_ref, cw_ref, cb_ref, trans_ref, start_ref, end_ref,
                tags_ref, em_scr, hist_scr):
    # One batch element per grid step. Mirrors torchcrf CRF._viterbi_decode.
    b = pl.program_id(0)
    S = h_ref.shape[1]
    L = trans_ref.shape[0]
    seq_len = seqlen_ref[b]

    # Fused classifier: emissions (S, L) computed in VMEM, never stored to HBM
    # (avoids a lane-sparse (M, 5) output from a standalone dense).
    em = jnp.dot(h_ref[0], cw_ref[...], preferred_element_type=jnp.float32) + cb_ref[...]
    em_scr[...] = em

    trans = trans_ref[...]
    from_iota = lax.broadcasted_iota(jnp.int32, (L, L), 0)
    col_iota = lax.broadcasted_iota(jnp.int32, (1, L), 1)

    # Positions beyond seq_len stay 0 (padded output).
    tags_ref[...] = jnp.zeros_like(tags_ref)

    score0 = start_ref[...] + em[0:1, :]                 # (1, L)

    def fwd(t, score):
        em_t = em_scr[pl.ds(t, 1), :]                    # (1, L) dynamic row load
        m = score.T + trans + em_t                       # (L_from, L_to)
        next_score = jnp.max(m, axis=0, keepdims=True)   # (1, L)
        bp = jnp.min(jnp.where(m == next_score, from_iota, L),
                     axis=0, keepdims=True).astype(jnp.int32)
        # NOTE: backpointers for t >= seq_len are written but never read
        # (backtracking starts at seq_len - 1).
        hist_scr[pl.ds(t, 1), :] = bp                    # dynamic row store
        return jnp.where(t < seq_len, next_score, score)

    score = lax.fori_loop(1, S, fwd, score0)
    score = score + end_ref[...]

    best = jnp.max(score, axis=1, keepdims=True)
    cur = jnp.min(jnp.where(score == best, col_iota, L),
                  axis=1, keepdims=True).astype(jnp.int32)        # (1, 1)
    seq_end = jnp.maximum(seq_len - 1, 0)
    tags_ref[0, pl.ds(seq_end, 1), :] = cur

    def bwd(i, cur):
        t = seq_end - 1 - i
        tc = jnp.maximum(t, 0)
        hist_row = hist_scr[pl.ds(tc + 1, 1), :]                  # (1, L)
        new_cur = jnp.sum(jnp.where(col_iota == cur, hist_row, 0),
                          axis=1, keepdims=True).astype(jnp.int32)
        valid = t >= 0
        cur = jnp.where(valid, new_cur, cur)

        @pl.when(valid)
        def _():
            tags_ref[0, pl.ds(tc, 1), :] = cur

        return cur

    lax.fori_loop(0, S - 1, bwd, cur)


def crf_decode(h, seq_lens, cls_w, cls_b, trans, start, end):
    B, S, H = h.shape
    L = trans.shape[0]
    out = pl.pallas_call(
        _crf_kernel,
        out_shape=jax.ShapeDtypeStruct((B, S, 1), jnp.int32),
        grid_spec=pltpu.PrefetchScalarGridSpec(
            num_scalar_prefetch=1,
            grid=(B,),
            in_specs=[pl.BlockSpec((1, S, H), lambda b, sl: (b, 0, 0)),
                      pl.BlockSpec((H, L), lambda b, sl: (0, 0)),
                      pl.BlockSpec((1, L), lambda b, sl: (0, 0)),
                      pl.BlockSpec((L, L), lambda b, sl: (0, 0)),
                      pl.BlockSpec((1, L), lambda b, sl: (0, 0)),
                      pl.BlockSpec((1, L), lambda b, sl: (0, 0))],
            out_specs=pl.BlockSpec((1, S, 1), lambda b, sl: (b, 0, 0)),
            scratch_shapes=[pltpu.VMEM((S, L), jnp.float32),
                            pltpu.VMEM((S, L), jnp.int32)],
        ),
        compiler_params=pltpu.CompilerParams(dimension_semantics=("parallel",)),
    )(seq_lens, h, cls_w, cls_b.reshape(1, L), trans,
      start.reshape(1, L), end.reshape(1, L))
    # TODO(synk): torchcrf .decode returns variable-length Python lists; here we
    # return a padded [B, S] int32 array (positions beyond mask length are 0).
    return out.reshape(B, S)


# ------------------------------ model (glue) --------------------------------

def init_params(key, V, H, I, L, n_layers, max_pos):
    ks = jax.random.split(key, 8 + n_layers)
    std = 0.02
    bf = jnp.bfloat16
    p = {
        "word_emb": (jax.random.normal(ks[0], (V, H)) * std).astype(bf),
        "pos_emb": (jax.random.normal(ks[1], (max_pos, H)) * std).astype(bf),
        "type_emb": (jax.random.normal(ks[2], (2, H)) * std).astype(bf),
        "emb_ln_g": jnp.ones((H,), jnp.float32), "emb_ln_b": jnp.zeros((H,), jnp.float32),
        "cls_w": (jax.random.normal(ks[3], (H, L)) * std).astype(bf),
        "cls_b": jnp.zeros((L,), jnp.float32),
        "crf_start": jax.random.normal(ks[4], (L,)) * 0.1,
        "crf_end": jax.random.normal(ks[5], (L,)) * 0.1,
        "crf_trans": jax.random.normal(ks[6], (L, L)) * 0.1,
        "layers": [],
    }
    for li in range(n_layers):
        lk = jax.random.split(ks[8 + li], 4)
        p["layers"].append({
            # fused QKV weight: columns [0:H]=Q, [H:2H]=K, [2H:3H]=V
            "qkv_w": (jax.random.normal(lk[0], (H, 3 * H)) * std).astype(bf),
            "qkv_b": jnp.zeros((3 * H,), jnp.float32),
            "ao_w": (jax.random.normal(lk[1], (H, H)) * std).astype(bf),
            "ao_b": jnp.zeros((H,), jnp.float32),
            "ln1_g": jnp.ones((H,), jnp.float32), "ln1_b": jnp.zeros((H,), jnp.float32),
            "i_w": (jax.random.normal(lk[2], (H, I)) * std).astype(bf),
            "i_b": jnp.zeros((I,), jnp.float32),
            "o_w": (jax.random.normal(lk[3], (I, H)) * std).astype(bf),
            "o_b": jnp.zeros((H,), jnp.float32),
            "ln2_g": jnp.ones((H,), jnp.float32), "ln2_b": jnp.zeros((H,), jnp.float32),
        })
    return p


def bert_crf_forward(params, input_ids, attention_mask, *, n_heads):
    B, S = input_ids.shape
    H = params["word_emb"].shape[1]
    Dh = H // n_heads

    # --- embeddings (gathers are XLA glue; LayerNorm in Pallas) ---
    pos_ids = jnp.arange(S)
    emb = (params["word_emb"][input_ids].astype(jnp.float32)
           + params["pos_emb"][pos_ids][None, :, :].astype(jnp.float32)
           + params["type_emb"][0][None, None, :].astype(jnp.float32))
    h = layernorm(emb.reshape(B * S, H), params["emb_ln_g"], params["emb_ln_b"])  # bf16

    # mask kept as (B, 1, S): no n_heads-fold broadcast materialized in HBM
    mask_bias = ((1.0 - attention_mask.astype(jnp.float32)) * -10000.0)[:, None, :]
    scale = 1.0 / math.sqrt(Dh)

    for lp in params["layers"]:
        # fully fused attention block (QKV proj + attention + out proj + residual + LN);
        # dropout: identity at inference.
        h3 = attention_block(h.reshape(B, S, H), lp["qkv_w"], lp["qkv_b"], mask_bias,
                             lp["ao_w"], lp["ao_b"], lp["ln1_g"], lp["ln1_b"],
                             n_heads=n_heads, scale=scale)
        # full FFN + residual + LayerNorm fused (dropout: eval identity)
        h = ffn_add_ln(h3.reshape(B * S, H), lp["i_w"], lp["i_b"], lp["o_w"], lp["o_b"],
                       lp["ln2_g"], lp["ln2_b"])

    # self.dropout(0.1) on sequence_output: identity at inference.
    # Classifier matmul is fused into the CRF kernel (no (M, num_labels) HBM array).
    seq_lens = jnp.sum(attention_mask, axis=-1).astype(jnp.int32)
    tags = crf_decode(h.reshape(B, S, H), seq_lens, params["cls_w"], params["cls_b"],
                      params["crf_trans"], params["crf_start"], params["crf_end"])
    return tags


if __name__ == "__main__":
    B, S = 2, 8
    V, H, I, L = 100, 32, 64, 5
    n_heads, n_layers, max_pos = 4, 2, 32

    key = jax.random.PRNGKey(0)
    pkey, ikey = jax.random.split(key)
    params = init_params(pkey, V, H, I, L, n_layers, max_pos)

    input_ids = jax.random.randint(ikey, (B, S), 0, V, dtype=jnp.int32)
    attention_mask = jnp.ones((B, S), jnp.int32)

    tags = bert_crf_forward(params, input_ids, attention_mask, n_heads=n_heads)
    jax.block_until_ready(tags)
    print("KERNEL_OK")
</pallas_src>

<mosaic_0001>
module attributes {stable_mosaic.version = 11 : i64} {
  func.func @_ln_kernel(%arg0: i32, %arg1: memref<16x32xf32, #tpu.memory_space<vmem>>, %arg2: memref<1x32xf32, #tpu.memory_space<vmem>>, %arg3: memref<1x32xf32, #tpu.memory_space<vmem>>, %arg4: memref<16x32xbf16, #tpu.memory_space<vmem>>) attributes {dimension_semantics = [#tpu.dimension_semantics<parallel>], iteration_bounds = array<i64: 1>, scalar_prefetch = 0 : i64, scratch_operands = 0 : i64, tpu.core_type = #tpu.core_type<tc>, window_params = [{transform_indices = @transform_0, window_bounds = array<i64: 16, 32>}, {pipeline_mode = #tpu.pipeline_mode<synchronous>, transform_indices = @transform_1, window_bounds = array<i64: 1, 32>}, {pipeline_mode = #tpu.pipeline_mode<synchronous>, transform_indices = @transform_2, window_bounds = array<i64: 1, 32>}, {transform_indices = @transform_3, window_bounds = array<i64: 16, 32>}]} {
    %c0 = arith.constant 0 : index
    %c0_0 = arith.constant 0 : index
    %0 = vector.load %arg1[%c0, %c0_0] : memref<16x32xf32, #tpu.memory_space<vmem>>, vector<16x32xf32>
    %c0_1 = arith.constant 0 : index
    %c0_2 = arith.constant 0 : index
    %1 = vector.load %arg2[%c0_1, %c0_2] : memref<1x32xf32, #tpu.memory_space<vmem>>, vector<1x32xf32>
    %c0_3 = arith.constant 0 : index
    %c0_4 = arith.constant 0 : index
    %2 = vector.load %arg3[%c0_3, %c0_4] : memref<1x32xf32, #tpu.memory_space<vmem>>, vector<1x32xf32>
    %cst = arith.constant dense<0.000000e+00> : vector<16xf32>
    %3 = vector.multi_reduction <add>, %0, %cst [1] : vector<16x32xf32> to vector<16xf32>
    %4 = vector.shape_cast %3 : vector<16xf32> to vector<16x1xf32>
    %cst_5 = arith.constant 3.200000e+01 : f32
    %5 = vector.broadcast %cst_5 : f32 to vector<16x1xf32>
    %6 = arith.divf %4, %5 : vector<16x1xf32>
    %7 = vector.broadcast %6 : vector<16x1xf32> to vector<16x32xf32>
    %8 = arith.subf %0, %7 : vector<16x32xf32>
    %9 = arith.mulf %8, %8 : vector<16x32xf32>
    %cst_6 = arith.constant dense<0.000000e+00> : vector<16xf32>
    %10 = vector.multi_reduction <add>, %9, %cst_6 [1] : vector<16x32xf32> to vector<16xf32>
    %11 = vector.shape_cast %10 : vector<16xf32> to vector<16x1xf32>
    %cst_7 = arith.constant 3.200000e+01 : f32
    %12 = vector.broadcast %cst_7 : f32 to vector<16x1xf32>
    %13 = arith.divf %11, %12 : vector<16x1xf32>
    %14 = vector.broadcast %6 : vector<16x1xf32> to vector<16x32xf32>
    %15 = arith.subf %0, %14 : vector<16x32xf32>
    %cst_8 = arith.constant 9.99999996E-13 : f32
    %16 = vector.broadcast %cst_8 : f32 to vector<16x1xf32>
    %17 = arith.addf %13, %16 : vector<16x1xf32>
    %18 = math.rsqrt %17 : vector<16x1xf32>
    %19 = vector.broadcast %18 : vector<16x1xf32> to vector<16x32xf32>
    %20 = arith.mulf %15, %19 : vector<16x32xf32>
    %21 = vector.broadcast %1 : vector<1x32xf32> to vector<16x32xf32>
    %22 = arith.mulf %20, %21 : vector<16x32xf32>
    %23 = vector.broadcast %2 : vector<1x32xf32> to vector<16x32xf32>
    %24 = arith.addf %22, %23 : vector<16x32xf32>
    %25 = arith.truncf %24 : vector<16x32xf32> to vector<16x32xbf16>
    %c0_9 = arith.constant 0 : index
    %c0_10 = arith.constant 0 : index
    %26 = vector.load %arg4[%c0_9, %c0_10] : memref<16x32xbf16, #tpu.memory_space<vmem>>, vector<16x32xbf16>
    tpu.vector_store %arg4[%c0_9, %c0_10], %25 {strides = array<i32>} : memref<16x32xbf16, #tpu.memory_space<vmem>>, vector<16x32xbf16>,
    return
  }
  func.func @transform_0(%arg0: i32) -> (i32, i32) {
    %c0_i32 = arith.constant 0 : i32
    %c0_i32_0 = arith.constant 0 : i32
    return %arg0, %c0_i32 : i32, i32
  }
  func.func @transform_1(%arg0: i32) -> (i32, i32) {
    %c0_i32 = arith.constant 0 : i32
    %c0_i32_0 = arith.constant 0 : i32
    %c0_i32_1 = arith.constant 0 : i32
    return %c0_i32, %c0_i32_0 : i32, i32
  }
  func.func @transform_2(%arg0: i32) -> (i32, i32) {
    %c0_i32 = arith.constant 0 : i32
    %c0_i32_0 = arith.constant 0 : i32
    %c0_i32_1 = arith.constant 0 : i32
    return %c0_i32, %c0_i32_0 : i32, i32
  }
  func.func @transform_3(%arg0: i32) -> (i32, i32) {
    %c0_i32 = arith.constant 0 : i32
    %c0_i32_0 = arith.constant 0 : i32
    return %arg0, %c0_i32 : i32, i32
  }
}

</mosaic_0001>

<llo_original>
// kernel: tpu_custom_call.1
$region0: #{tpu_custom_call.1}
  #allocation0 [shape = 'u32[]', space=smem, size = 0x4, offset = 0x4, fixed_abs, tag = 'smem constant byte address 0x4 - core index']
  #allocation1 [shape = 'u32[72,128]{1,0:T(1,128)}', space=vmem, size = 0x9000, scoped, tag = 'internal scratch']
  %s0 = inlined_call_operand.hbm [shape: f32[16,32], index: 0, kind: input, shape index: {}]
  %s1 = inlined_call_operand.hbm [shape: f32[1,32], index: 1, kind: input, shape index: {}]
  %s2 = inlined_call_operand.vmem [shape: f32[1,32], index: 2, kind: input, shape index: {}]
  %s3 = inlined_call_operand.hbm [shape: bf16[16,32], index: 3, kind: output, shape index: {}]
  %s4 = sld [smem:[#allocation0]]
  $region30: #{tpu_custom_call.1} parent=0
    _
  %s6 = ssub.s32 1, %s4
  %s7 = scalar_select 0, %s6, %s4
  $region1: #{tpu_custom_call.1} parent=0
    #allocation2 [shape = 'u8[8192]{0}', space=vmem, size = 0x2000, scoped, tag = 'input window, operand 0, single buffered']
    #allocation3 [shape = 's32[1]{0}', space=sflag, size = 0x4, scoped, tag = 'scoped memory for tpu_custom_call.1']
    #allocation4 [shape = 's32[1]{0}', space=sflag, size = 0x4, scoped, tag = 'scoped memory for tpu_custom_call.1']
    #allocation5 [shape = 'u8[512]{0}', space=vmem, size = 0x400, scoped, tag = 'input window, operand 1, single buffered']
    #allocation6 [shape = 's32[1]{0}', space=sflag, size = 0x4, scoped, tag = 'scoped memory for tpu_custom_call.1']
    #allocation7 [shape = 'u8[4096]{0}', space=vmem, size = 0x1000, scoped, tag = 'output window, operand 0, single buffered']
    %8 = vsyncpa [#allocation3], 0
    %9 = vsyncpa [#allocation6], 0
    %10 = vsyncpa [#allocation4], 0
    // Predicated region
    $region2: #{tpu_custom_call.1} parent=1 // pred_check
      _
    $region3: #{tpu_custom_call.1} parent=1 // pred_check_branch
      %12 = sbr.rel (0) target = $region5
    $region4: #{tpu_custom_call.1} parent=1 // pred_region
      %14 = vsyncadd [#allocation3], 0
      %s15 = sshll.u32 %s0, 4
      %s16 = int_to_ptr.hbm [resolvable:$true] %s15
      %s17 = sshll.u32 [#allocation2], 4
      %s18 = int_to_ptr.vmem [resolvable:$true] %s17
      %23 = dma.hbm_to_vmem [thread:$0]  %s16, 256, %s18, [#allocation3], 128, 128, 8
    $region5: #{tpu_custom_call.1} parent=1 // pred_fallthru
      _
    // Predicated region
    $region6: #{tpu_custom_call.1} parent=1 // pred_check
      _
    $region7: #{tpu_custom_call.1} parent=1 // pred_check_branch
      %25 = sbr.rel (0) target = $region9
    $region8: #{tpu_custom_call.1} parent=1 // pred_region
      %27 = vsyncadd [#allocation6], 0
      %s29 = sshll.u32 %s1, 4
      %s30 = int_to_ptr.hbm [resolvable:$true] %s29
      %s31 = sshll.u32 [#allocation5], 4
      %s32 = int_to_ptr.vmem [resolvable:$true] %s31
      %34 = dma.hbm_to_vmem [thread:$0]  %s30, 16, %s32, [#allocation6]
    $region9: #{tpu_custom_call.1} parent=1 // pred_fallthru
      _
    // Predicated region
    $region10: #{tpu_custom_call.1} parent=1 // pred_check
      _
    $region11: #{tpu_custom_call.1} parent=1 // pred_check_branch
      %36 = sbr.rel (0) target = $region13
    $region12: #{tpu_custom_call.1} parent=1 // pred_region
      _
    $region13: #{tpu_custom_call.1} parent=1 // pred_fallthru
      _
    // Predicated region
    $region14: #{tpu_custom_call.1} parent=1 // pred_check
      _
    $region15: #{tpu_custom_call.1} parent=1 // pred_check_branch
      %38 = sbr.rel (0) target = $region17
    $region16: #{tpu_custom_call.1} parent=1 // pred_region
      %40 = dma.done [#allocation3], 256
    $region17: #{tpu_custom_call.1} parent=1 // pred_fallthru
      _
    // Predicated region
    $region18: #{tpu_custom_call.1} parent=1 // pred_check
      _
    $region19: #{tpu_custom_call.1} parent=1 // pred_check_branch
      %42 = sbr.rel (0) target = $region21
    $region20: #{tpu_custom_call.1} parent=1 // pred_region
      %44 = dma.done [#allocation6], 16
    $region21: #{tpu_custom_call.1} parent=1 // pred_fallthru
      _
    %v45 = vld [vmem:[#allocation2] sm:$0xff]
    %v46 = vld [vmem:[#allocation2 + $0x8] sm:$0xff]
    %v47 = vld [vmem:[#allocation5] sm:$0x1]
    %v48 = vld [vmem:[%s2] sm:$0x1]
    %vm49 = vcmask 261120
    %v50 = vsel %vm49, %v45, 0.0
    %51 = vadd.xlane.f32.xlu0 %v50
    %v52 = vpop.xlane.xlu0 %51
    %v53 = vsel %vm49, %v46, 0.0
    %54 = vadd.xlane.f32.xlu0 %v53
    %v55 = vpop.xlane.xlu0 %54
    %v56 = vrcp.pop 32.0
    %v57 = vmul.f32 32.0, %v56
    %v58 = vsub.f32 1.0, %v57
    %v59 = vmul.f32 %v56, %v58
    %v60 = vadd.f32 %v56, %v59
    %vm61 = vweird.f32 %v56
    %v62 = vsel %vm61, %v56, %v60
    %v63 = vmul.f32 %v52, %v62
    %v64 = vmul.f32 %v55, %v62
    %v65 = vsub.f32 %v45, %v63
    %v66 = vsub.f32 %v46, %v64
    %v67 = vmul.f32 %v65, %v65
    %v68 = vmul.f32 %v66, %v66
    %v69 = vsel %vm49, %v67, 0.0
    %70 = vadd.xlane.f32.xlu0 %v69
    %v71 = vpop.xlane.xlu0 %70
    %v72 = vsel %vm49, %v68, 0.0
    %73 = vadd.xlane.f32.xlu0 %v72
    %v74 = vpop.xlane.xlu0 %73
    %v75 = vmul.f32 %v71, %v62
    %v76 = vmul.f32 %v74, %v62
    %v77 = vadd.f32 %v75, 1e-12
    %v78 = vadd.f32 %v76, 1e-12
    %v79 = vrsqrt.pop %v77
    %v80 = vmul.f32 %v79, %v77
    %v81 = vmul.f32 %v80, %v79
    %v82 = vmul.f32 0.5, %v81
    %v83 = vsub.f32 1.5, %v82
    %v84 = vmul.f32 %v79, %v83
    %vm85 = vweird.f32 %v77
    %vm86 = vweird.f32 %v79
    %vm87 = vmor %vm85, %vm86
    %v88 = vsel %vm87, %v79, %v84
    %v89 = vrsqrt.pop %v78
    %v90 = vmul.f32 %v89, %v78
    %v91 = vmul.f32 %v90, %v89
    %v92 = vmul.f32 0.5, %v91
    %v93 = vsub.f32 1.5, %v92
    %v94 = vmul.f32 %v89, %v93
    %vm95 = vweird.f32 %v78
    %vm96 = vweird.f32 %v89
    %vm97 = vmor %vm95, %vm96
    %v98 = vsel %vm97, %v89, %v94
    %v99 = vmul.f32 %v65, %v88
    %v100 = vmul.f32 %v66, %v98
    %v102 = vperm.slane %v47, 0
    %v104 = vmul.f32 %v99, %v102
    %v105 = vmul.f32 %v100, %v102
    %v107 = vperm.slane %v48, 0
    %v109 = vadd.f32 %v104, %v107
    %v110 = vadd.f32 %v105, %v107
    %v111 = vpack.c.bf16 %v109, %v109
    %v112 = vpack.c.bf16 %v110, %v110
    %vm113 = vcmask 257024
    %114 = vst.msk [vmem:[#allocation7] sm:$0xf] %vm113, %v111
    %115 = vst.msk [vmem:[#allocation7 + $0x4] sm:$0xf] %vm113, %v112
    // Predicated region
    $region22: #{tpu_custom_call.1} parent=1 // pred_check
      _
    $region23: #{tpu_custom_call.1} parent=1 // pred_check_branch
      %117 = sbr.rel (0) target = $region25
    $region24: #{tpu_custom_call.1} parent=1 // pred_region
      %119 = vsyncadd [#allocation4], 0
      %s120 = sshll.u32 [#allocation7], 4
      %s121 = int_to_ptr.vmem [resolvable:$true] %s120
      %s122 = sshll.u32 %s3, 4
      %s123 = int_to_ptr.hbm [resolvable:$true] %s122
      %128 = dma.vmem_to_hbm [thread:$0]  %s121, 128, %s123, [#allocation4], 64, 64, 4
    $region25: #{tpu_custom_call.1} parent=1 // pred_fallthru
      _
    // Predicated region
    $region26: #{tpu_custom_call.1} parent=1 // pred_check
      _
    $region27: #{tpu_custom_call.1} parent=1 // pred_check_branch
      %130 = sbr.rel (0) target = $region29
    $region28: #{tpu_custom_call.1} parent=1 // pred_region
      %132 = dma.done [#allocation4], 128
    $region29: #{tpu_custom_call.1} parent=1 // pred_fallthru
      _
    %133 = vsyncpa [#allocation3], 1
    %134 = vsyncpa [#allocation6], 1
    %135 = vsyncpa [#allocation4], 1

</llo_original>
